<compile_context>
chip_gen: v5e
topology: v5e:2x2
jax: 0.10.0
libtpu: 0.0.40
codegen_flags: <defaults>
</compile_context>

<pallas_src>
import numpy as np
import jax
import jax.numpy as jnp
from jax.experimental import pallas as pl
from jax.experimental.pallas import tpu as pltpu

LANE = 128


# ---------------------------------------------------------------------------
# Host-side (numpy) filter construction.
# ---------------------------------------------------------------------------
def sinc_lowpass_taps(cutoff_hz, sr, num_taps=31):
    # TODO(synk): julius (torch-audiomentations) uses a cutoff-dependent kernel length
    # (zeros=8); a fixed 31-tap Hamming-windowed sinc is used here.
    fc = cutoff_hz / sr
    n = np.arange(num_taps) - (num_taps - 1) / 2.0
    h = 2.0 * fc * np.sinc(2.0 * fc * n)
    h *= np.hamming(num_taps)
    h /= h.sum()
    return h.astype(np.float64)


def composed_fir_taps(hp_cutoff_hz, lp_cutoff_hz, sr, num_taps=31):
    """One centered FIR equivalent to HPF (x - lowpass_hp(x)) followed by LPF."""
    # TODO(synk): composing the two 'same'-padded 31-tap filters into one 61-tap
    # 'same'-padded FIR differs from a faithful cascade in the first/last ~30 samples.
    a = sinc_lowpass_taps(hp_cutoff_hz, sr, num_taps)   # HPF's lowpass prototype
    b = sinc_lowpass_taps(lp_cutoff_hz, sr, num_taps)   # LPF taps
    K = 2 * num_taps - 1
    g = np.zeros(K, np.float64)
    pad = (K - num_taps) // 2
    g[pad:pad + num_taps] = b                           # delta(center) conv b
    g -= np.convolve(a, b)                              # minus (a conv b)
    return g                                            # length 61, centered


def banded_conv_matrices(g, L=LANE):
    """Banded LxL matrices so that, for consecutive L-sample lane rows x_i,
    same-padded conv with centered g is x_{i-1}@C_left + x_i@C_center + x_{i+1}@C_right."""
    K = len(g)
    P = (K - 1) // 2
    assert P < L, "FIR half-width must fit within one lane tile"
    M = np.zeros((3 * L, L), np.float32)
    for t in range(L):
        for k in range(K):
            M[L + t + k - P, t] += g[k]
    return np.stack([M[:L], M[L:2 * L], M[2 * L:]])     # (3, L, L): left, center, right


def gen_colored_noise(key, shape, f_decay, sr):
    # rfft/irfft spectral shaping has no Pallas equivalent -> plain JAX (XLA FFT).
    B, T = shape
    white = jax.random.normal(key, (B, T), dtype=jnp.float32)
    spec = jnp.fft.rfft(white, axis=-1)
    freqs = jnp.linspace(1.0, (sr / 2.0) ** 0.5, spec.shape[-1])
    spec = spec * (1.0 / (freqs ** f_decay))
    return jnp.fft.irfft(spec, n=T, axis=-1).astype(jnp.float32)


# ---------------------------------------------------------------------------
# Pallas kernel: one (example, time-tile) per grid step.
# Noise-add + 61-tap FIR (3 banded bf16 MXU matmuls) + gain fused.
# ---------------------------------------------------------------------------
def make_aug_kernel(gain_lin):
    f32 = jnp.float32
    bf16 = jnp.bfloat16

    def kernel(scale_ref, x_ref, n_ref, halo_ref, c_ref, o_ref):
        b = pl.program_id(0)
        scale = scale_ref[b]                       # per-example SNR scale (SMEM scalar)

        x = x_ref[0]                               # (nt_tile, 128) f32
        nz = n_ref[0]                              # (nt_tile, 128) f32

        # --- AddColoredNoise (scale precomputed in the wrapper) ---
        y = x + nz * scale

        # --- neighbour lane-rows: halo (already noise-mixed, zero at clip edges)
        #     plus an in-VMEM sublane shift of the current tile ---
        h = halo_ref[0, 0]                         # (2, 128): [prev_row, next_row]
        y_prev = jnp.concatenate([h[0:1, :], y[:-1, :]], axis=0)
        y_next = jnp.concatenate([y[1:, :], h[1:2, :]], axis=0)

        # --- HPF ∘ LPF as one banded FIR on the MXU (bf16 operands, f32 accum) ---
        yb, ypb, ynb = y.astype(bf16), y_prev.astype(bf16), y_next.astype(bf16)
        filt = (jnp.dot(yb, c_ref[1], preferred_element_type=f32)
                + jnp.dot(ypb, c_ref[0], preferred_element_type=f32)
                + jnp.dot(ynb, c_ref[2], preferred_element_type=f32))

        # --- Gain ---  (SpeedPerturbation factor 1.0 -> identity resample)
        o_ref[0] = (filt * gain_lin).astype(o_ref.dtype)

    return kernel


def waveform_augment(wav, noise, *, sr=16000.0, snr_db=25.0, hp_cutoff_hz=440.0,
                     lp_cutoff_hz=3000.0, gain_db=-5.0, num_taps=31, nt_tile=None):
    B, T = wav.shape
    assert T % LANE == 0, "T must be a multiple of 128"
    Nt = T // LANE

    if nt_tile is None:
        nt_tile = Nt
        for cand in (512, 256, 128, 64, 32, 16, 8):   # ~<=256 KiB f32 per tile per array
            if Nt % cand == 0:
                nt_tile = cand
                break
    assert Nt % nt_tile == 0
    assert nt_tile % 8 == 0 or nt_tile == Nt
    n_tiles = Nt // nt_tile

    g = composed_fir_taps(hp_cutoff_hz, lp_cutoff_hz, sr, num_taps)
    c_bands = jnp.asarray(banded_conv_matrices(g)).astype(jnp.bfloat16)   # (3,128,128)

    inv_snr = float(10.0 ** (-snr_db / 20.0))
    gain_lin = float(10.0 ** (gain_db / 20.0))

    wav32 = wav.astype(jnp.float32)
    noise32 = noise.astype(jnp.float32)

    # --- hoisted SNR reduction (fuses for free in XLA) ---
    # TODO(synk): eps-guarded ratio blows up for (near-)silent noise; torch's RMS path differs.
    sig_e = jnp.sum(wav32 * wav32, axis=-1)
    noi_e = jnp.sum(noise32 * noise32, axis=-1)
    scale = (jnp.sqrt(sig_e / (noi_e + 1e-12)) * inv_snr).astype(jnp.float32)   # (B,)

    wav_r = wav32.reshape(B, Nt, LANE)                 # free row-major view
    noise_r = noise32.reshape(B, Nt, LANE)

    # --- 1-row halos per time tile (already noise-mixed, zero at clip edges) ---
    sc_b = scale.reshape(B, 1, 1)
    zero_row = jnp.zeros((B, 1, LANE), jnp.float32)
    prev_rows = jnp.concatenate(
        [zero_row,
         wav_r[:, nt_tile - 1:Nt - 1:nt_tile, :]
         + noise_r[:, nt_tile - 1:Nt - 1:nt_tile, :] * sc_b], axis=1)      # (B, n_tiles, 128)
    next_rows = jnp.concatenate(
        [wav_r[:, nt_tile::nt_tile, :]
         + noise_r[:, nt_tile::nt_tile, :] * sc_b,
         zero_row], axis=1)                                                # (B, n_tiles, 128)
    halo = jnp.stack([prev_rows, next_rows], axis=2)                       # (B, n_tiles, 2, 128)

    out = pl.pallas_call(
        make_aug_kernel(gain_lin),
        out_shape=jax.ShapeDtypeStruct((B, Nt, LANE), jnp.float32),
        grid_spec=pltpu.PrefetchScalarGridSpec(
            num_scalar_prefetch=1,                      # per-example SNR scale -> SMEM
            grid=(B, n_tiles),
            in_specs=[
                pl.BlockSpec((1, nt_tile, LANE), lambda b, j, s: (b, j, 0)),   # wav tile
                pl.BlockSpec((1, nt_tile, LANE), lambda b, j, s: (b, j, 0)),   # noise tile
                pl.BlockSpec((1, 1, 2, LANE), lambda b, j, s: (b, j, 0, 0)),   # halo rows
                pl.BlockSpec((3, LANE, LANE), lambda b, j, s: (0, 0, 0)),      # FIR bands
            ],
            out_specs=pl.BlockSpec((1, nt_tile, LANE), lambda b, j, s: (b, j, 0)),
        ),
        compiler_params=pltpu.CompilerParams(
            dimension_semantics=("parallel", "parallel"),
            vmem_limit_bytes=32 * 1024 * 1024,
        ),
    )(scale, wav_r, noise_r, halo, c_bands)

    # SpeedPerturbation factor fixed to 1.0 (member of [0.9, 1.1, 1.0]) -> identity.
    # TODO(synk): fractional windowed-sinc resampling kernel for factors 0.9 / 1.1.
    # TODO(synk): for very short clips, pack several batch rows per block to amortize
    #             the fixed per-grid-step cost.
    return out.reshape(B, T)


if __name__ == "__main__":
    B, T = 2, 2048
    sr = 16000.0
    snr_db, hp_hz, lp_hz, gain_db, num_taps = 25.0, 440.0, 3000.0, -5.0, 31

    key = jax.random.PRNGKey(0)
    k_wav, k_noise = jax.random.split(key)
    wav = jax.random.normal(k_wav, (B, T), dtype=jnp.float32)
    noise = gen_colored_noise(k_noise, (B, T), f_decay=0.0, sr=sr)

    # small nt_tile so the demo exercises multiple time tiles + the halo path
    out = waveform_augment(wav, noise, sr=sr, snr_db=snr_db, hp_cutoff_hz=hp_hz,
                           lp_cutoff_hz=lp_hz, gain_db=gain_db, num_taps=num_taps,
                           nt_tile=8)
    out = jax.block_until_ready(out)

    # Pure-JAX f32 reference of the same deterministic pipeline.
    g = composed_fir_taps(hp_hz, lp_hz, sr, num_taps)
    K = len(g)
    P = (K - 1) // 2
    inv_snr = 10.0 ** (-snr_db / 20.0)
    gain_lin = 10.0 ** (gain_db / 20.0)
    sig_e = jnp.sum(wav * wav, axis=-1, keepdims=True)
    noi_e = jnp.sum(noise * noise, axis=-1, keepdims=True)
    y_ref = wav + noise * (jnp.sqrt(sig_e / (noi_e + 1e-12)) * inv_snr)
    y_pad = jnp.pad(y_ref, ((0, 0), (P, P)))
    ref = sum(float(g[k]) * y_pad[:, k:k + T] for k in range(K)) * gain_lin

    assert out.shape == (B, T) and out.dtype == jnp.float32
    assert bool(jnp.all(jnp.isfinite(out)))
    err = float(jnp.max(jnp.abs(out - ref)))
    assert err < 5e-2, f"kernel vs reference max abs error too large: {err}"
    print("KERNEL_OK")
</pallas_src>

<mosaic_0001>
module attributes {stable_mosaic.version = 11 : i64} {
  func.func @kernel(%arg0: i32, %arg1: i32, %arg2: memref<2xf32, #tpu.memory_space<smem>>, %arg3: memref<1x8x128xf32, #tpu.memory_space<vmem>>, %arg4: memref<1x8x128xf32, #tpu.memory_space<vmem>>, %arg5: memref<1x1x2x128xf32, #tpu.memory_space<vmem>>, %arg6: memref<3x128x128xbf16, #tpu.memory_space<vmem>>, %arg7: memref<1x8x128xf32, #tpu.memory_space<vmem>>) attributes {dimension_semantics = [#tpu.dimension_semantics<parallel>, #tpu.dimension_semantics<parallel>], iteration_bounds = array<i64: 2, 2>, scalar_prefetch = 1 : i64, scratch_operands = 0 : i64, tpu.core_type = #tpu.core_type<tc>, window_params = [{transform_indices = @transform_0, window_bounds = array<i64: 1, 8, 128>}, {transform_indices = @transform_1, window_bounds = array<i64: 1, 8, 128>}, {transform_indices = @transform_2, window_bounds = array<i64: 1, 1, 2, 128>}, {pipeline_mode = #tpu.pipeline_mode<synchronous>, transform_indices = @transform_3, window_bounds = array<i64: 3, 128, 128>}, {transform_indices = @transform_4, window_bounds = array<i64: 1, 8, 128>}]} {
    %0 = arith.index_cast %arg0 : i32 to index
    %1 = memref.load %arg2[%0] : memref<2xf32, #tpu.memory_space<smem>>
    %c0 = arith.constant 0 : index
    %c0_0 = arith.constant 0 : index
    %c0_1 = arith.constant 0 : index
    %2 = vector.load %arg3[%c0, %c0_0, %c0_1] : memref<1x8x128xf32, #tpu.memory_space<vmem>>, vector<1x8x128xf32>
    %3 = vector.shape_cast %2 : vector<1x8x128xf32> to vector<8x128xf32>
    %c0_2 = arith.constant 0 : index
    %c0_3 = arith.constant 0 : index
    %c0_4 = arith.constant 0 : index
    %4 = vector.load %arg4[%c0_2, %c0_3, %c0_4] : memref<1x8x128xf32, #tpu.memory_space<vmem>>, vector<1x8x128xf32>
    %5 = vector.shape_cast %4 : vector<1x8x128xf32> to vector<8x128xf32>
    %6 = vector.broadcast %1 : f32 to vector<8x128xf32>
    %7 = arith.mulf %5, %6 : vector<8x128xf32>
    %8 = arith.addf %3, %7 : vector<8x128xf32>
    %c0_5 = arith.constant 0 : index
    %c0_6 = arith.constant 0 : index
    %c0_7 = arith.constant 0 : index
    %c0_8 = arith.constant 0 : index
    %9 = vector.load %arg5[%c0_5, %c0_6, %c0_7, %c0_8] : memref<1x1x2x128xf32, #tpu.memory_space<vmem>>, vector<1x1x2x128xf32>
    %10 = vector.shape_cast %9 : vector<1x1x2x128xf32> to vector<2x128xf32>
    %11 = vector.extract_strided_slice %10 {offsets = [0, 0], sizes = [1, 128], strides = [1, 1]} : vector<2x128xf32> to vector<1x128xf32>
    %12 = vector.extract_strided_slice %8 {offsets = [0, 0], sizes = [7, 128], strides = [1, 1]} : vector<8x128xf32> to vector<7x128xf32>
    %13 = tpu.concatenate %11, %12 in 0 : vector<1x128xf32>, vector<7x128xf32> -> vector<8x128xf32>
    %14 = vector.extract_strided_slice %8 {offsets = [1, 0], sizes = [7, 128], strides = [1, 1]} : vector<8x128xf32> to vector<7x128xf32>
    %15 = vector.extract_strided_slice %10 {offsets = [1, 0], sizes = [1, 128], strides = [1, 1]} : vector<2x128xf32> to vector<1x128xf32>
    %16 = tpu.concatenate %14, %15 in 0 : vector<7x128xf32>, vector<1x128xf32> -> vector<8x128xf32>
    %17 = arith.truncf %8 : vector<8x128xf32> to vector<8x128xbf16>
    %18 = arith.truncf %13 : vector<8x128xf32> to vector<8x128xbf16>
    %19 = arith.truncf %16 : vector<8x128xf32> to vector<8x128xbf16>
    %c1 = arith.constant 1 : index
    %c0_9 = arith.constant 0 : index
    %c0_10 = arith.constant 0 : index
    %20 = vector.load %arg6[%c1, %c0_9, %c0_10] : memref<3x128x128xbf16, #tpu.memory_space<vmem>>, vector<1x128x128xbf16>
    %21 = vector.shape_cast %20 : vector<1x128x128xbf16> to vector<128x128xbf16>
    %cst = arith.constant dense<0.000000e+00> : vector<8x128xf32>
    %22 = tpu.matmul %17, %21, %cst {dimension_numbers = #tpu.dot_dimension_numbers<[1], [0], [0], [1], [0, 0, 1, 1], [], []>} : vector<8x128xbf16>, vector<128x128xbf16>, vector<8x128xf32> -> vector<8x128xf32>
    %c0_11 = arith.constant 0 : index
    %c0_12 = arith.constant 0 : index
    %c0_13 = arith.constant 0 : index
    %23 = vector.load %arg6[%c0_11, %c0_12, %c0_13] : memref<3x128x128xbf16, #tpu.memory_space<vmem>>, vector<1x128x128xbf16>
    %24 = vector.shape_cast %23 : vector<1x128x128xbf16> to vector<128x128xbf16>
    %cst_14 = arith.constant dense<0.000000e+00> : vector<8x128xf32>
    %25 = tpu.matmul %18, %24, %cst_14 {dimension_numbers = #tpu.dot_dimension_numbers<[1], [0], [0], [1], [0, 0, 1, 1], [], []>} : vector<8x128xbf16>, vector<128x128xbf16>, vector<8x128xf32> -> vector<8x128xf32>
    %26 = arith.addf %22, %25 : vector<8x128xf32>
    %c2 = arith.constant 2 : index
    %c0_15 = arith.constant 0 : index
    %c0_16 = arith.constant 0 : index
    %27 = vector.load %arg6[%c2, %c0_15, %c0_16] : memref<3x128x128xbf16, #tpu.memory_space<vmem>>, vector<1x128x128xbf16>
    %28 = vector.shape_cast %27 : vector<1x128x128xbf16> to vector<128x128xbf16>
    %cst_17 = arith.constant dense<0.000000e+00> : vector<8x128xf32>
    %29 = tpu.matmul %19, %28, %cst_17 {dimension_numbers = #tpu.dot_dimension_numbers<[1], [0], [0], [1], [0, 0, 1, 1], [], []>} : vector<8x128xbf16>, vector<128x128xbf16>, vector<8x128xf32> -> vector<8x128xf32>
    %30 = arith.addf %26, %29 : vector<8x128xf32>
    %cst_18 = arith.constant 0.562341332 : f32
    %31 = vector.broadcast %cst_18 : f32 to vector<8x128xf32>
    %32 = arith.mulf %30, %31 : vector<8x128xf32>
    %c0_19 = arith.constant 0 : index
    %c0_20 = arith.constant 0 : index
    %c0_21 = arith.constant 0 : index
    %33 = vector.load %arg7[%c0_19, %c0_20, %c0_21] : memref<1x8x128xf32, #tpu.memory_space<vmem>>, vector<1x8x128xf32>
    %34 = vector.shape_cast %33 : vector<1x8x128xf32> to vector<8x128xf32>
    %35 = vector.shape_cast %32 : vector<8x128xf32> to vector<1x8x128xf32>
    tpu.vector_store %arg7[%c0_19, %c0_20, %c0_21], %35 {strides = array<i32>} : memref<1x8x128xf32, #tpu.memory_space<vmem>>, vector<1x8x128xf32>,
    return
  }
  func.func @transform_0(%arg0: i32, %arg1: i32, %arg2: memref<2xf32, #tpu.memory_space<smem>>) -> (i32, i32, i32) {
    %c0_i32 = arith.constant 0 : i32
    %c0_i32_0 = arith.constant 0 : i32
    return %arg0, %arg1, %c0_i32 : i32, i32, i32
  }
  func.func @transform_1(%arg0: i32, %arg1: i32, %arg2: memref<2xf32, #tpu.memory_space<smem>>) -> (i32, i32, i32) {
    %c0_i32 = arith.constant 0 : i32
    %c0_i32_0 = arith.constant 0 : i32
    return %arg0, %arg1, %c0_i32 : i32, i32, i32
  }
  func.func @transform_2(%arg0: i32, %arg1: i32, %arg2: memref<2xf32, #tpu.memory_space<smem>>) -> (i32, i32, i32, i32) {
    %c0_i32 = arith.constant 0 : i32
    %c0_i32_0 = arith.constant 0 : i32
    %c0_i32_1 = arith.constant 0 : i32
    return %arg0, %arg1, %c0_i32, %c0_i32_0 : i32, i32, i32, i32
  }
  func.func @transform_3(%arg0: i32, %arg1: i32, %arg2: memref<2xf32, #tpu.memory_space<smem>>) -> (i32, i32, i32) {
    %c0_i32 = arith.constant 0 : i32
    %c0_i32_0 = arith.constant 0 : i32
    %c0_i32_1 = arith.constant 0 : i32
    %c0_i32_2 = arith.constant 0 : i32
    return %c0_i32, %c0_i32_0, %c0_i32_1 : i32, i32, i32
  }
  func.func @transform_4(%arg0: i32, %arg1: i32, %arg2: memref<2xf32, #tpu.memory_space<smem>>) -> (i32, i32, i32) {
    %c0_i32 = arith.constant 0 : i32
    %c0_i32_0 = arith.constant 0 : i32
    return %arg0, %arg1, %c0_i32 : i32, i32, i32
  }
}

</mosaic_0001>

<llo_original>
// kernel: tpu_custom_call.1
$region0: #{tpu_custom_call.1}
  #allocation0 [shape = 'u32[]', space=smem, size = 0x4, offset = 0x4, fixed_abs, tag = 'smem constant byte address 0x4 - core index']
  #allocation1 [shape = 'u32[72,128]{1,0:T(1,128)}', space=vmem, size = 0x9000, scoped, tag = 'internal scratch']
  #allocation2 [shape = 's32[1]{0}', space=sflag, size = 0x4, scoped, tag = 'scoped memory for tpu_custom_call.1']
  #allocation3 [shape = 'u8[512]{0}', space=smem, size = 0x200, scoped, tag = 'prefetched SMEM operand 0']
  %s0 = inlined_call_operand.hbm [shape: f32[2], index: 0, kind: input, shape index: {}]
  %s1 = inlined_call_operand.hbm [shape: f32[2,16,128], index: 1, kind: input, shape index: {}]
  %s2 = inlined_call_operand.hbm [shape: f32[2,16,128], index: 2, kind: input, shape index: {}]
  %s3 = inlined_call_operand.hbm [shape: f32[2,2,2,128], index: 3, kind: input, shape index: {}]
  %s4 = inlined_call_operand.hbm [shape: bf16[3,128,128], index: 4, kind: input, shape index: {}]
  %s5 = inlined_call_operand.hbm [shape: f32[2,16,128], index: 5, kind: output, shape index: {}]
  %s6 = sld [smem:[#allocation0]]
  $region65: #{tpu_custom_call.1} parent=0
    _
  %s8 = ssub.s32 1, %s6
  %s9 = scalar_select 0, %s8, %s6
  %s11 = sshll.u32 %s0, 4
  %s12 = int_to_ptr.hbm [resolvable:$true] %s11
  %14 = dma.hbm_to_smem %s12, 16, [#allocation3], [#allocation2]
  %16 = dma.done [#allocation2], 16
  %17 = sfence
  $region1: #{tpu_custom_call.1} parent=0
    #allocation4 [shape = 'u8[8192]{0}', space=vmem, size = 0x2000, scoped, tag = 'input window, operand 1']
    #allocation5 [shape = 's32[2]{0}', space=sflag, size = 0x8, scoped, tag = 'scoped memory for tpu_custom_call.1']
    #allocation6 [shape = 's32[2]{0}', space=sflag, size = 0x8, scoped, tag = 'scoped memory for tpu_custom_call.1']
    #allocation7 [shape = 'u8[8192]{0}', space=vmem, size = 0x2000, scoped, tag = 'input window, operand 2']
    #allocation8 [shape = 's32[2]{0}', space=sflag, size = 0x8, scoped, tag = 'scoped memory for tpu_custom_call.1']
    #allocation9 [shape = 'u8[2048]{0}', space=vmem, size = 0x800, scoped, tag = 'input window, operand 3']
    #allocation10 [shape = 'u8[98304]{0}', space=vmem, size = 0x18000, scoped, tag = 'input window, operand 4, single buffered']
    #allocation11 [shape = 's32[1]{0}', space=sflag, size = 0x4, scoped, tag = 'scoped memory for tpu_custom_call.1']
    #allocation12 [shape = 'u8[8192]{0}', space=vmem, size = 0x2000, scoped, tag = 'output window, operand 0']
    %18 = vsyncpa [#allocation5], 0
    %s19 = scalar_lea.sflag [#allocation5], 1
    %20 = vsyncpa %s19, 0
    %21 = vsyncpa [#allocation8], 0
    %s22 = scalar_lea.sflag [#allocation8], 1
    %23 = vsyncpa %s22, 0
    %24 = vsyncpa [#allocation11], 0
    %25 = vsyncpa [#allocation6], 0
    %s26 = scalar_lea.sflag [#allocation6], 1
    %27 = vsyncpa %s26, 0
    loop: start=0, step=1, limit=6
    $region2: #{tpu_custom_call.1} parent=1 // loop_pre_header
      _
    $region3: #{tpu_custom_call.1} parent=1 // loop_header
      %s29 = sphi 0, %s33
      %p30 = scmp.ge.s32.totalorder %s29, 6
      %s36 = sphi 0, %s48
      %s37 = sphi 0, %s44
      %s38 = sphi 0, %s36
      %s39 = sphi 0, %s37
      %s40 = sphi 0, %s38
      %s41 = sphi 0, %s39
      %s53 = sphi 0, %s55
      %s56 = sphi 0, %s53
      %s57 = sphi 0, %s56
      %s73 = sphi 0, %s57
      %s81 = sphi 0, %s83
      %s84 = sphi 0, %s81
      %s85 = sphi 0, %s84
      %s101 = sphi 0, %s85
      %s109 = sphi 0, %s111
      %s112 = sphi 0, %s109
      %s113 = sphi 0, %s112
      %s129 = sphi 0, %s113
      %s133 = sphi 0, %s133
      %s135 = sphi 0, %s133
      %s136 = sphi 0, %s135
      %s150 = sphi 0, %s136
      %s158 = sphi 0, %s160
      %s161 = sphi 0, %s158
      %s162 = sphi 0, %s161
      %s178 = sphi 0, %s162
    $region4: #{tpu_custom_call.1} parent=1 // loop_header_branch
      %32 = sbr.rel (%p30) target = $region8
    $region5: #{tpu_custom_call.1} parent=1 // loop_body
      %s34 = ssub.s32 %s29, 1
      %s35 = ssub.s32 %s29, 2
      %s42 = sadd.s32 1, %s37
      %p43 = scmp.ge.s32.totalorder %s42, 2
      %s44 = scalar_select %p43, 0, %s42
      %s45 = sadd.s32 1, %s36
      %s46 = scalar_select %p43, %s45, %s36
      %p47 = scmp.ge.s32.totalorder %s46, 2
      %s48 = scalar_select %p47, 0, %s46
      %s49 = ssub.s32 %s36, %s48
      %s50 = ssub.s32 %s37, %s44
      %s51 = sor.u32 %s49, %s50
      %p52 = scmp.eq.s32.totalorder %s51, 0
      %s54 = sadd.s32 %s53, 1
      %s55 = scalar_select %p52, %s53, %s54
      %p58 = pneg %p52
      %p59 = scmp.eq.s32.totalorder %s29, 3
      %p60 = por %p58, %p59
      %p61 = scmp.ne.s32.totalorder %s53, %s56
      %p62 = scmp.eq.s32.totalorder %s29, 0
      %p63 = por %p61, %p62
      %p64 = scmp.ne.s32.totalorder %s53, %s56
      %p65 = scmp.eq.s32.totalorder %s34, 3
      %p66 = por %p64, %p65
      %p67 = scmp.ne.s32.totalorder %s56, %s57
      %p68 = scmp.eq.s32.totalorder %s34, 0
      %p69 = por %p67, %p68
      %p70 = scmp.ne.s32.totalorder %s56, %s57
      %p71 = scmp.eq.s32.totalorder %s35, 3
      %p72 = por %p70, %p71
      %p74 = scmp.ne.s32.totalorder %s57, %s73
      %p75 = scmp.eq.s32.totalorder %s35, 0
      %p76 = por %p74, %p75
      %s77 = ssub.s32 %s36, %s48
      %s78 = ssub.s32 %s37, %s44
      %s79 = sor.u32 %s77, %s78
      %p80 = scmp.eq.s32.totalorder %s79, 0
      %s82 = sadd.s32 %s81, 1
      %s83 = scalar_select %p80, %s81, %s82
      %p86 = pneg %p80
      %p87 = scmp.eq.s32.totalorder %s29, 3
      %p88 = por %p86, %p87
      %p89 = scmp.ne.s32.totalorder %s81, %s84
      %p90 = scmp.eq.s32.totalorder %s29, 0
      %p91 = por %p89, %p90
      %p92 = scmp.ne.s32.totalorder %s81, %s84
      %p93 = scmp.eq.s32.totalorder %s34, 3
      %p94 = por %p92, %p93
      %p95 = scmp.ne.s32.totalorder %s84, %s85
      %p96 = scmp.eq.s32.totalorder %s34, 0
      %p97 = por %p95, %p96
      %p98 = scmp.ne.s32.totalorder %s84, %s85
      %p99 = scmp.eq.s32.totalorder %s35, 3
      %p100 = por %p98, %p99
      %p102 = scmp.ne.s32.totalorder %s85, %s101
      %p103 = scmp.eq.s32.totalorder %s35, 0
      %p104 = por %p102, %p103
      %s105 = ssub.s32 %s36, %s48
      %s106 = ssub.s32 %s37, %s44
      %s107 = sor.u32 %s105, %s106
      %p108 = scmp.eq.s32.totalorder %s107, 0
      %s110 = sadd.s32 %s109, 1
      %s111 = scalar_select %p108, %s109, %s110
      %p114 = pneg %p108
      %p115 = scmp.eq.s32.totalorder %s29, 3
      %p116 = por %p114, %p115
      %p117 = scmp.ne.s32.totalorder %s109, %s112
      %p118 = scmp.eq.s32.totalorder %s29, 0
      %p119 = por %p117, %p118
      %p120 = scmp.ne.s32.totalorder %s109, %s112
      %p121 = scmp.eq.s32.totalorder %s34, 3
      %p122 = por %p120, %p121
      %p123 = scmp.ne.s32.totalorder %s112, %s113
      %p124 = scmp.eq.s32.totalorder %s34, 0
      %p125 = por %p123, %p124
      %p126 = scmp.ne.s32.totalorder %s112, %s113
      %p127 = scmp.eq.s32.totalorder %s35, 3
      %p128 = por %p126, %p127
      %p130 = scmp.ne.s32.totalorder %s113, %s129
      %p131 = scmp.eq.s32.totalorder %s35, 0
      %p132 = por %p130, %p131
      %s134 = sadd.s32 %s133, 1
      %p137 = scmp.eq.s32.totalorder %s29, 3
      %p138 = scmp.ne.s32.totalorder %s133, %s135
      %p139 = scmp.eq.s32.totalorder %s29, 0
      %p140 = por %p138, %p139
      %p141 = scmp.ne.s32.totalorder %s133, %s135
      %p142 = scmp.eq.s32.totalorder %s34, 3
      %p143 = por %p141, %p142
      %p144 = scmp.ne.s32.totalorder %s135, %s136
      %p145 = scmp.eq.s32.totalorder %s34, 0
      %p146 = por %p144, %p145
      %p147 = scmp.ne.s32.totalorder %s135, %s136
      %p148 = scmp.eq.s32.totalorder %s35, 3
      %p149 = por %p147, %p148
      %p151 = scmp.ne.s32.totalorder %s136, %s150
      %p152 = scmp.eq.s32.totalorder %s35, 0
      %p153 = por %p151, %p152
      %s154 = ssub.s32 %s36, %s48
      %s155 = ssub.s32 %s37, %s44
      %s156 = sor.u32 %s154, %s155
      %p157 = scmp.eq.s32.totalorder %s156, 0
      %s159 = sadd.s32 %s158, 1
      %s160 = scalar_select %p157, %s158, %s159
      %p163 = pneg %p157
      %p164 = scmp.eq.s32.totalorder %s29, 3
      %p165 = por %p163, %p164
      %p166 = scmp.ne.s32.totalorder %s158, %s161
      %p167 = scmp.eq.s32.totalorder %s29, 0
      %p168 = por %p166, %p167
      %p169 = scmp.ne.s32.totalorder %s158, %s161
      %p170 = scmp.eq.s32.totalorder %s34, 3
      %p171 = por %p169, %p170
      %p172 = scmp.ne.s32.totalorder %s161, %s162
      %p173 = scmp.eq.s32.totalorder %s34, 0
      %p174 = por %p172, %p173
      %p175 = scmp.ne.s32.totalorder %s161, %s162
      %p176 = scmp.eq.s32.totalorder %s35, 3
      %p177 = por %p175, %p176
      %p179 = scmp.ne.s32.totalorder %s162, %s178
      %p180 = scmp.eq.s32.totalorder %s35, 0
      %p181 = por %p179, %p180
      %p182 = scmp.le.s32.totalorder 1, %s29
      %p183 = scmp.lt.s32.totalorder %s29, 5
      %p184 = pnand %p182, %p183
      %p185 = pneg %p184
      // Predicated region
      $region9: #{tpu_custom_call.1} parent=5 // pred_check
        _
      $region10: #{tpu_custom_call.1} parent=5 // pred_check_branch
        %187 = sbr.rel (%p184) target = $region12
      $region11: #{tpu_custom_call.1} parent=5 // pred_region
        %s188 = ssub.s32 %s29, 1
        // Predicated region
        $region13: #{tpu_custom_call.1} parent=11 // pred_check
          %p189 = pneg %p146
        $region14: #{tpu_custom_call.1} parent=11 // pred_check_branch
          %191 = sbr.rel (%p189) target = $region16
        $region15: #{tpu_custom_call.1} parent=11 // pred_region
          %193 = vsyncadd [#allocation11], 0
          %s194 = sshll.u32 %s4, 4
          %s195 = int_to_ptr.hbm [resolvable:$true] %s194
          %s196 = sshll.u32 [#allocation10], 4
          %s197 = int_to_ptr.vmem [resolvable:$true] %s196
          %202 = dma.hbm_to_vmem [thread:$0]  %s195, 3072, %s197, [#allocation11], 64, 64, 4
        $region16: #{tpu_custom_call.1} parent=11 // pred_fallthru
          _
      $region12: #{tpu_custom_call.1} parent=5 // pred_fallthru
        _
      %p203 = scmp.lt.s32.totalorder %s29, 4
      // Predicated region
      $region17: #{tpu_custom_call.1} parent=5 // pred_check
        %p204 = pneg %p203
      $region18: #{tpu_custom_call.1} parent=5 // pred_check_branch
        %206 = sbr.rel (%p204) target = $region20
      $region19: #{tpu_custom_call.1} parent=5 // pred_region
        // Predicated region
        $region21: #{tpu_custom_call.1} parent=19 // pred_check
          %p207 = pneg %p63
        $region22: #{tpu_custom_call.1} parent=19 // pred_check_branch
          %209 = sbr.rel (%p207) target = $region24
        $region23: #{tpu_custom_call.1} parent=19 // pred_region
          %s210 = sand.u32 %s53, 1
          %s211 = scalar_lea.sflag [#allocation5], %s210
          %s212 = sand.u32 %s53, 1
          %s213 = smul.addr %s212, 8
          %s214 = scalar_lea.vmem [#allocation4], %s213
          %216 = vsyncadd %s211, 0
          %s217 = smul.addr %s36, 2
          %s218 = sadd.s32 %s37, %s217
          %s219 = smul.addr %s218, 8
          %s220 = scalar_lea.hbm %s1, %s219
          %s222 = sshll.u32 %s220, 4
          %s223 = int_to_ptr.hbm [resolvable:$true] %s222
          %s224 = sshll.u32 %s214, 4
          %s225 = int_to_ptr.vmem [resolvable:$true] %s224
          %227 = dma.hbm_to_vmem [thread:$0]  %s223, 128, %s225, %s211
        $region24: #{tpu_custom_call.1} parent=19 // pred_fallthru
          _
        // Predicated region
        $region25: #{tpu_custom_call.1} parent=19 // pred_check
          %p228 = pneg %p91
        $region26: #{tpu_custom_call.1} parent=19 // pred_check_branch
          %230 = sbr.rel (%p228) target = $region28
        $region27: #{tpu_custom_call.1} parent=19 // pred_region
          %s231 = sand.u32 %s29, 1
          %s232 = scalar_lea.sflag [#allocation8], %s231
          %s233 = sand.u32 %s81, 1
          %s234 = smul.addr %s233, 8
          %s235 = scalar_lea.vmem [#allocation7], %s234
          %237 = vsyncadd %s232, 0
          %s238 = smul.addr %s36, 2
          %s239 = sadd.s32 %s37, %s238
          %s240 = smul.addr %s239, 8
          %s241 = scalar_lea.hbm %s2, %s240
          %s243 = sshll.u32 %s241, 4
          %s244 = int_to_ptr.hbm [resolvable:$true] %s243
          %s245 = sshll.u32 %s235, 4
          %s246 = int_to_ptr.vmem [resolvable:$true] %s245
          %248 = dma.hbm_to_vmem [thread:$0]  %s244, 128, %s246, %s232
        $region28: #{tpu_custom_call.1} parent=19 // pred_fallthru
          _
        // Predicated region
        $region29: #{tpu_custom_call.1} parent=19 // pred_check
          %p249 = pneg %p119
        $region30: #{tpu_custom_call.1} parent=19 // pred_check_branch
          %251 = sbr.rel (%p249) target = $region32
        $region31: #{tpu_custom_call.1} parent=19 // pred_region
          %s252 = sand.u32 %s29, 1
          %s253 = scalar_lea.sflag [#allocation8], %s252
          %s254 = sand.u32 %s109, 1
          %s255 = smul.addr %s254, 2
          %s256 = scalar_lea.vmem [#allocation9], %s255
          %258 = vsyncadd %s253, 0
          %s259 = smul.addr %s36, 2
          %s260 = sadd.s32 %s37, %s259
          %s261 = smul.addr %s260, 2
          %s262 = scalar_lea.hbm %s3, %s261
          %s264 = sshll.u32 %s262, 4
          %s265 = int_to_ptr.hbm [resolvable:$true] %s264
          %s266 = sshll.u32 %s256, 4
          %s267 = int_to_ptr.vmem [resolvable:$true] %s266
          %269 = dma.hbm_to_vmem [thread:$0]  %s265, 32, %s267, %s253
        $region32: #{tpu_custom_call.1} parent=19 // pred_fallthru
          _
      $region20: #{tpu_custom_call.1} parent=5 // pred_fallthru
        _
      %p270 = scmp.le.s32.totalorder 1, %s29
      %p271 = scmp.lt.s32.totalorder %s29, 5
      %p272 = pnand %p270, %p271
      %p273 = pneg %p272
      // Predicated region
      $region33: #{tpu_custom_call.1} parent=5 // pred_check
        _
      $region34: #{tpu_custom_call.1} parent=5 // pred_check_branch
        %275 = sbr.rel (%p272) target = $region36
      $region35: #{tpu_custom_call.1} parent=5 // pred_region
        %s276 = ssub.s32 %s29, 1
        %s277 = sand.u32 %s56, 1
        %s278 = scalar_lea.sflag [#allocation5], %s277
        %s279 = sand.u32 %s56, 1
        %s280 = smul.addr %s279, 8
        %s281 = scalar_lea.vmem [#allocation4], %s280
        // Predicated region
        $region37: #{tpu_custom_call.1} parent=35 // pred_check
          %p282 = pneg %p69
        $region38: #{tpu_custom_call.1} parent=35 // pred_check_branch
          %284 = sbr.rel (%p282) target = $region40
        $region39: #{tpu_custom_call.1} parent=35 // pred_region
          %286 = dma.done %s278, 128
        $region40: #{tpu_custom_call.1} parent=35 // pred_fallthru
          _
        %s287 = sand.u32 %s34, 1
        %s288 = scalar_lea.sflag [#allocation8], %s287
        %s289 = sand.u32 %s84, 1
        %s290 = smul.addr %s289, 8
        %s291 = scalar_lea.vmem [#allocation7], %s290
        // Predicated region
        $region41: #{tpu_custom_call.1} parent=35 // pred_check
          %p292 = pneg %p97
        $region42: #{tpu_custom_call.1} parent=35 // pred_check_branch
          %294 = sbr.rel (%p292) target = $region44
        $region43: #{tpu_custom_call.1} parent=35 // pred_region
          %296 = dma.done %s288, 128
        $region44: #{tpu_custom_call.1} parent=35 // pred_fallthru
          _
        %s297 = sand.u32 %s34, 1
        %s298 = scalar_lea.sflag [#allocation8], %s297
        %s299 = sand.u32 %s112, 1
        %s300 = smul.addr %s299, 2
        %s301 = scalar_lea.vmem [#allocation9], %s300
        // Predicated region
        $region45: #{tpu_custom_call.1} parent=35 // pred_check
          %p302 = pneg %p125
        $region46: #{tpu_custom_call.1} parent=35 // pred_check_branch
          %304 = sbr.rel (%p302) target = $region48
        $region47: #{tpu_custom_call.1} parent=35 // pred_region
          %306 = dma.done %s298, 32
        $region48: #{tpu_custom_call.1} parent=35 // pred_fallthru
          _
        // Predicated region
        $region49: #{tpu_custom_call.1} parent=35 // pred_check
          %p307 = pneg %p146
        $region50: #{tpu_custom_call.1} parent=35 // pred_check_branch
          %309 = sbr.rel (%p307) target = $region52
        $region51: #{tpu_custom_call.1} parent=35 // pred_region
          %311 = dma.done [#allocation11], 3072
        $region52: #{tpu_custom_call.1} parent=35 // pred_fallthru
          _
        %s312 = sand.u32 %s56, 1
        %s313 = scalar_lea.sflag [#allocation5], %s312
        %s314 = sand.u32 %s56, 1
        %s315 = smul.addr %s314, 8
        %s316 = scalar_lea.vmem [#allocation4], %s315
        %p317 = pneg %p69
        %p318 = pneg %p66
        %s319 = sand.u32 %s34, 1
        %s320 = scalar_lea.sflag [#allocation8], %s319
        %s321 = sand.u32 %s84, 1
        %s322 = smul.addr %s321, 8
        %s323 = scalar_lea.vmem [#allocation7], %s322
        %p324 = pneg %p97
        %p325 = pneg %p94
        %s326 = sand.u32 %s34, 1
        %s327 = scalar_lea.sflag [#allocation8], %s326
        %s328 = sand.u32 %s112, 1
        %s329 = smul.addr %s328, 2
        %s330 = scalar_lea.vmem [#allocation9], %s329
        %p331 = pneg %p125
        %p332 = pneg %p122
        %p333 = pneg %p146
        %p334 = pneg %p143
        %p335 = pneg %p174
        %p336 = pneg %p171
        %s337 = sand.u32 %s161, 1
        %s338 = scalar_lea.sflag [#allocation6], %s337
        %s339 = sand.u32 %s161, 1
        %s340 = smul.addr %s339, 8
        %s341 = scalar_lea.vmem [#allocation12], %s340
        %s342 = sld [smem:[#allocation3 + %s38]]
        %v343 = vld [vmem:[%s281] sm:$0xff]
        %v344 = vld [vmem:[%s291] sm:$0xff]
        %v345 = vstv %s342
        %v346 = vmul.f32 %v344, %v345
        %v347 = vadd.f32 %v343, %v346
        %v348 = vld [vmem:[%s301] sm:$0x3]
        %v350 = vrot.slane %v347, 7
        %vm352 = vcmask 1040384
        %v353 = vsel %vm352, %v348, %v350
        %v354 = vrot.slane %v347, 1
        %v357 = vrot.slane %v348, 2
        %vm359 = vcmask 1046528
        %v360 = vsel %vm359, %v354, %v357
        %v361 = vpack.c.bf16 %v347, %v347
        %v362 = vpack.c.bf16 %v353, %v353
        %v363 = vpack.c.bf16 %v360, %v360
        %s364 = scalar_lea.vmem [#allocation10], 64
        %v365 = vld [vmem:[%s364] sm:$0xf]
        %v366 = vld [vmem:[%s364 + $0x4] sm:$0xf]
        %v367 = vld [vmem:[%s364 + $0x8] sm:$0xf]
        %v368 = vld [vmem:[%s364 + $0xc] sm:$0xf]
        %v369 = vld [vmem:[%s364 + $0x10] sm:$0xf]
        %v370 = vld [vmem:[%s364 + $0x14] sm:$0xf]
        %v371 = vld [vmem:[%s364 + $0x18] sm:$0xf]
        %v372 = vld [vmem:[%s364 + $0x1c] sm:$0xf]
        %v373 = vld [vmem:[%s364 + $0x20] sm:$0xf]
        %v374 = vld [vmem:[%s364 + $0x24] sm:$0xf]
        %v375 = vld [vmem:[%s364 + $0x28] sm:$0xf]
        %v376 = vld [vmem:[%s364 + $0x2c] sm:$0xf]
        %v377 = vld [vmem:[%s364 + $0x30] sm:$0xf]
        %v378 = vld [vmem:[%s364 + $0x34] sm:$0xf]
        %v379 = vld [vmem:[%s364 + $0x38] sm:$0xf]
        %v380 = vld [vmem:[%s364 + $0x3c] sm:$0xf]
        %v381 = vld [vmem:[#allocation10] sm:$0xf]
        %v382 = vld [vmem:[#allocation10 + $0x4] sm:$0xf]
        %v383 = vld [vmem:[#allocation10 + $0x8] sm:$0xf]
        %v384 = vld [vmem:[#allocation10 + $0xc] sm:$0xf]
        %v385 = vld [vmem:[#allocation10 + $0x10] sm:$0xf]
        %v386 = vld [vmem:[#allocation10 + $0x14] sm:$0xf]
        %v387 = vld [vmem:[#allocation10 + $0x18] sm:$0xf]
        %v388 = vld [vmem:[#allocation10 + $0x1c] sm:$0xf]
        %v389 = vld [vmem:[#allocation10 + $0x20] sm:$0xf]
        %v390 = vld [vmem:[#allocation10 + $0x24] sm:$0xf]
        %v391 = vld [vmem:[#allocation10 + $0x28] sm:$0xf]
        %v392 = vld [vmem:[#allocation10 + $0x2c] sm:$0xf]
        %v393 = vld [vmem:[#allocation10 + $0x30] sm:$0xf]
        %v394 = vld [vmem:[#allocation10 + $0x34] sm:$0xf]
        %v395 = vld [vmem:[#allocation10 + $0x38] sm:$0xf]
        %v396 = vld [vmem:[#allocation10 + $0x3c] sm:$0xf]
        %v413 = vunpack.c.l.b16 %v381
        %v414 = vunpack.c.l.b16 %v382
        %v415 = vunpack.c.l.b16 %v383
        %v416 = vunpack.c.l.b16 %v384
        %v417 = vunpack.c.l.b16 %v385
        %v418 = vunpack.c.l.b16 %v386
        %v419 = vunpack.c.l.b16 %v387
        %v420 = vunpack.c.l.b16 %v388
        %v421 = vunpack.c.l.b16 %v389
        %v422 = vunpack.c.l.b16 %v390
        %v423 = vunpack.c.l.b16 %v391
        %v424 = vunpack.c.l.b16 %v392
        %v425 = vunpack.c.l.b16 %v393
        %v426 = vunpack.c.l.b16 %v394
        %v427 = vunpack.c.l.b16 %v395
        %v428 = vunpack.c.l.b16 %v396
        %v429 = vpack.c.b16 %v414, %v413
        %v430 = vpack.c.b16 %v416, %v415
        %v431 = vpack.c.b16 %v418, %v417
        %v432 = vpack.c.b16 %v420, %v419
        %v433 = vpack.c.b16 %v422, %v421
        %v434 = vpack.c.b16 %v424, %v423
        %v435 = vpack.c.b16 %v426, %v425
        %v436 = vpack.c.b16 %v428, %v427
        %445 = vmatpush.bf16.msra.mxu0 %v436
        %446 = vmatpush.bf16.msra.mxu0 %v435
        %447 = vmatpush.bf16.msra.mxu0 %v434
        %448 = vmatpush.bf16.msra.mxu0 %v433
        %449 = vmatpush.bf16.msra.mxu0 %v432
        %450 = vmatpush.bf16.msra.mxu0 %v431
        %451 = vmatpush.bf16.msra.mxu0 %v430
        %452 = vmatpush.bf16.msra.mxu0 %v429
        %453 = vmatmul.bf16.gmra.mxu0 %v362
        %v454 = vpop.f32.mrf.mxu0
        %v455 = vadd.f32 0.0, %v454
        %v456 = vpop.f32.mrf.mxu0
        %457 = vdwg.mxu0
        %v474 = vunpack.c.l.b16 %v365
        %v475 = vunpack.c.l.b16 %v366
        %v476 = vunpack.c.l.b16 %v367
        %v477 = vunpack.c.l.b16 %v368
        %v478 = vunpack.c.l.b16 %v369
        %v479 = vunpack.c.l.b16 %v370
        %v480 = vunpack.c.l.b16 %v371
        %v481 = vunpack.c.l.b16 %v372
        %v482 = vunpack.c.l.b16 %v373
        %v483 = vunpack.c.l.b16 %v374
        %v484 = vunpack.c.l.b16 %v375
        %v485 = vunpack.c.l.b16 %v376
        %v486 = vunpack.c.l.b16 %v377
        %v487 = vunpack.c.l.b16 %v378
        %v488 = vunpack.c.l.b16 %v379
        %v489 = vunpack.c.l.b16 %v380
        %v490 = vpack.c.b16 %v475, %v474
        %v491 = vpack.c.b16 %v477, %v476
        %v492 = vpack.c.b16 %v479, %v478
        %v493 = vpack.c.b16 %v481, %v480
        %v494 = vpack.c.b16 %v483, %v482
        %v495 = vpack.c.b16 %v485, %v484
        %v496 = vpack.c.b16 %v487, %v486
        %v497 = vpack.c.b16 %v489, %v488
        %506 = vmatpush.bf16.msra.mxu0 %v497
        %507 = vmatpush.bf16.msra.mxu0 %v496
        %508 = vmatpush.bf16.msra.mxu0 %v495
        %509 = vmatpush.bf16.msra.mxu0 %v494
        %510 = vmatpush.bf16.msra.mxu0 %v493
        %511 = vmatpush.bf16.msra.mxu0 %v492
        %512 = vmatpush.bf16.msra.mxu0 %v491
        %513 = vmatpush.bf16.msra.mxu0 %v490
        %514 = vmatmul.bf16.gmra.mxu0 %v361
        %v515 = vpop.f32.mrf.mxu0
        %v516 = vadd.f32 %v455, %v515
        %v517 = vpop.f32.mrf.mxu0
        %518 = vdwg.mxu0
        %s519 = scalar_lea.vmem [#allocation10], 128
        %v520 = vld [vmem:[%s519] sm:$0xf]
        %v521 = vld [vmem:[%s519 + $0x4] sm:$0xf]
        %v522 = vld [vmem:[%s519 + $0x8] sm:$0xf]
        %v523 = vld [vmem:[%s519 + $0xc] sm:$0xf]
        %v524 = vld [vmem:[%s519 + $0x10] sm:$0xf]
        %v525 = vld [vmem:[%s519 + $0x14] sm:$0xf]
        %v526 = vld [vmem:[%s519 + $0x18] sm:$0xf]
        %v527 = vld [vmem:[%s519 + $0x1c] sm:$0xf]
        %v528 = vld [vmem:[%s519 + $0x20] sm:$0xf]
        %v529 = vld [vmem:[%s519 + $0x24] sm:$0xf]
        %v530 = vld [vmem:[%s519 + $0x28] sm:$0xf]
        %v531 = vld [vmem:[%s519 + $0x2c] sm:$0xf]
        %v532 = vld [vmem:[%s519 + $0x30] sm:$0xf]
        %v533 = vld [vmem:[%s519 + $0x34] sm:$0xf]
        %v534 = vld [vmem:[%s519 + $0x38] sm:$0xf]
        %v535 = vld [vmem:[%s519 + $0x3c] sm:$0xf]
        %v552 = vunpack.c.l.b16 %v520
        %v553 = vunpack.c.l.b16 %v521
        %v554 = vunpack.c.l.b16 %v522
        %v555 = vunpack.c.l.b16 %v523
        %v556 = vunpack.c.l.b16 %v524
        %v557 = vunpack.c.l.b16 %v525
        %v558 = vunpack.c.l.b16 %v526
        %v559 = vunpack.c.l.b16 %v527
        %v560 = vunpack.c.l.b16 %v528
        %v561 = vunpack.c.l.b16 %v529
        %v562 = vunpack.c.l.b16 %v530
        %v563 = vunpack.c.l.b16 %v531
        %v564 = vunpack.c.l.b16 %v532
        %v565 = vunpack.c.l.b16 %v533
        %v566 = vunpack.c.l.b16 %v534
        %v567 = vunpack.c.l.b16 %v535
        %v568 = vpack.c.b16 %v553, %v552
        %v569 = vpack.c.b16 %v555, %v554
        %v570 = vpack.c.b16 %v557, %v556
        %v571 = vpack.c.b16 %v559, %v558
        %v572 = vpack.c.b16 %v561, %v560
        %v573 = vpack.c.b16 %v563, %v562
        %v574 = vpack.c.b16 %v565, %v564
        %v575 = vpack.c.b16 %v567, %v566
        %584 = vmatpush.bf16.msra.mxu0 %v575
        %585 = vmatpush.bf16.msra.mxu0 %v574
        %586 = vmatpush.bf16.msra.mxu0 %v573
        %587 = vmatpush.bf16.msra.mxu0 %v572
        %588 = vmatpush.bf16.msra.mxu0 %v571
        %589 = vmatpush.bf16.msra.mxu0 %v570
        %590 = vmatpush.bf16.msra.mxu0 %v569
        %591 = vmatpush.bf16.msra.mxu0 %v568
        %592 = vmatmul.bf16.gmra.mxu0 %v363
        %v593 = vpop.f32.mrf.mxu0
        %v594 = vadd.f32 0.0, %v593
        %v595 = vpop.f32.mrf.mxu0
        %596 = vdwg.mxu0
        %v597 = vadd.f32 %v516, %v594
        %v598 = vmul.f32 %v597, 0.56234133
        %599 = vst [vmem:[%s341] sm:$0xff] %v598
        %s600 = sand.u32 %s161, 1
        %s601 = scalar_lea.sflag [#allocation6], %s600
        %s602 = sand.u32 %s161, 1
        %s603 = smul.addr %s602, 8
        %s604 = scalar_lea.vmem [#allocation12], %s603
        // Predicated region
        $region53: #{tpu_custom_call.1} parent=35 // pred_check
          %p605 = pneg %p171
        $region54: #{tpu_custom_call.1} parent=35 // pred_check_branch
          %607 = sbr.rel (%p605) target = $region56
        $region55: #{tpu_custom_call.1} parent=35 // pred_region
          %609 = vsyncadd %s601, 0
          %s610 = smul.addr %s38, 2
          %s611 = sadd.s32 %s39, %s610
          %s612 = smul.addr %s611, 8
          %s613 = scalar_lea.hbm %s5, %s612
          %s615 = sshll.u32 %s604, 4
          %s616 = int_to_ptr.vmem [resolvable:$true] %s615
          %s617 = sshll.u32 %s613, 4
          %s618 = int_to_ptr.hbm [resolvable:$true] %s617
          %620 = dma.vmem_to_hbm [thread:$0]  %s616, 128, %s618, %s601
        $region56: #{tpu_custom_call.1} parent=35 // pred_fallthru
          _
      $region36: #{tpu_custom_call.1} parent=5 // pred_fallthru
        _
      %p621 = scmp.le.s32.totalorder 2, %s29
      // Predicated region
      $region57: #{tpu_custom_call.1} parent=5 // pred_check
        %p622 = pneg %p621
      $region58: #{tpu_custom_call.1} parent=5 // pred_check_branch
        %624 = sbr.rel (%p622) target = $region60
      $region59: #{tpu_custom_call.1} parent=5 // pred_region
        %s625 = ssub.s32 %s29, 2
        // Predicated region
        $region61: #{tpu_custom_call.1} parent=59 // pred_check
          %p626 = pneg %p177
        $region62: #{tpu_custom_call.1} parent=59 // pred_check_branch
          %628 = sbr.rel (%p626) target = $region64
        $region63: #{tpu_custom_call.1} parent=59 // pred_region
          %s629 = sand.u32 %s162, 1
          %s630 = scalar_lea.sflag [#allocation6], %s629
          %s631 = sand.u32 %s162, 1
          %s632 = smul.addr %s631, 8
          %s633 = scalar_lea.vmem [#allocation12], %s632
          %635 = dma.done %s630, 128
        $region64: #{tpu_custom_call.1} parent=59 // pred_fallthru
          _
      $region60: #{tpu_custom_call.1} parent=5 // pred_fallthru
        _
    $region6: #{tpu_custom_call.1} parent=1 // loop_footer
      %s33 = sadd.s32 1, %s29
    $region7: #{tpu_custom_call.1} parent=1 // loop_footer_branch
      %28 = sbr.rel target = $region3
    $region8: #{tpu_custom_call.1} parent=1 // loop_exit
      _
    %636 = vsyncpa [#allocation5], 1
    %s637 = scalar_lea.sflag [#allocation5], 1
    %638 = vsyncpa %s637, 1
    %639 = vsyncpa [#allocation8], 1
    %s640 = scalar_lea.sflag [#allocation8], 1
    %641 = vsyncpa %s640, 1
    %642 = vsyncpa [#allocation11], 1
    %643 = vsyncpa [#allocation6], 1
    %s644 = scalar_lea.sflag [#allocation6], 1
    %645 = vsyncpa %s644, 1

</llo_original>
